<compile_context>
chip_gen: v5e
topology: v5e:2x2
jax: 0.10.0
libtpu: 0.0.40
codegen_flags: <defaults>
</compile_context>

<pallas_src>
import jax
import jax.numpy as jnp
from jax.experimental import pallas as pl
from jax.experimental.pallas import tpu as pltpu


def _round_up(x, m):
    return ((x + m - 1) // m) * m


# Conservative double-buffered VMEM budget (v7x has 64 MiB/TC; v5e/v6e 128 MiB).
_VMEM_BUDGET = 48 << 20


def _vmem_bytes(b_pad, tf, tk):
    # double-buffered x (bf16) + W (bf16) + out (f32) tiles, plus the tiny bias.
    return (2 * b_pad * tf * 2) + (2 * tf * tk * 2) + (2 * b_pad * tk * 4) + (2 * tk * 4)


def _choose_tiles(b_pad_budget, F, K):
    # --- K tiling: 1-2 lane-dense tiles (2 when possible -> both v7x TCs) ---
    k_pad128 = _round_up(K, 128)
    if k_pad128 <= 128:
        tk = k_pad128
    elif k_pad128 % 256 == 0:
        tk = min(1024, k_pad128 // 2)
    else:
        tk = 128
    k_pad = _round_up(k_pad128, tk)

    # --- F tiling: largest tf (multiple of 512, <= 8192) under the VMEM
    #     budget, preferring a tf that divides the padded F exactly. ---
    f512 = _round_up(F, 512)
    tf_any, tf_div = 512, None
    tf = 512
    while tf <= min(8192, f512):
        if _vmem_bytes(b_pad_budget, tf, tk) <= _VMEM_BUDGET:
            tf_any = tf
            if f512 % tf == 0:
                tf_div = tf
        tf += 512
    tf = tf_div if tf_div is not None else tf_any
    f_pad = _round_up(F, tf)
    return tf, tk, f_pad, k_pad


def _wrapmodel_kernel(x_ref, w_ref, b_ref, o_ref):
    """One (K-tile, F-tile) grid step of  logits = x @ W' + b'.

    x_ref: (B_pad, tf) bf16  input tile
    w_ref: (tf, tk)    bf16  folded-normalization weight tile
    b_ref: (1, tk)     f32   folded bias tile
    o_ref: (B_pad, tk) f32   logits tile, resident across the F (reduction) axis
    """
    f_step = pl.program_id(1)

    # The output block index only depends on the K axis, so o_ref stays
    # resident across the F axis: seed it with the bias, then accumulate the
    # partial products straight into it (no scratch accumulator, no epilogue).
    @pl.when(f_step == 0)
    def _():
        o_ref[...] = jnp.broadcast_to(b_ref[...], o_ref.shape)

    o_ref[...] += jnp.dot(
        x_ref[...], w_ref[...], preferred_element_type=jnp.float32
    )


def prepare_wrap_model(mean_c, std_c, w, b, spatial, max_batch=256):
    """One-time weight prep (hoisted out of the per-call forward).

    Folds the per-channel normalization into the classifier head:
        W' = (1/std)_f[:, None] * W ,   b' = b - ((mean/std)_f) @ W
    then casts/pads W' to lane-dense bf16 and b' to f32 once, so every forward
    call streams W exactly once (the Pallas GEMM).

    mean_c, std_c: (C,) f32;  w: (F, K) f32 with F = C*spatial;  b: (K,) f32.
    `max_batch` is the expected per-call batch, used for VMEM tile budgeting.
    """
    F, K = w.shape
    inv_std_f = jnp.repeat(1.0 / std_c, spatial)            # (F,)
    mean_f = jnp.repeat(mean_c, spatial)                     # (F,)
    w_fold = inv_std_f[:, None] * w                          # (F, K) f32
    b_fold = b - (mean_f * inv_std_f) @ w                    # (K,)   f32

    b_pad_budget = _round_up(max(max_batch, 16), 16)
    tf, tk, f_pad, k_pad = _choose_tiles(b_pad_budget, F, K)

    w_p = jnp.zeros((f_pad, k_pad), jnp.bfloat16).at[:F, :K].set(
        w_fold.astype(jnp.bfloat16)
    )
    b_p = jnp.zeros((1, k_pad), jnp.float32).at[0, :K].set(b_fold)

    return {
        "w_p": w_p, "b_p": b_p,
        "F": F, "K": K, "tf": tf, "tk": tk, "F_pad": f_pad, "K_pad": k_pad,
    }


def wrap_model_forward(x_nchw, prep):
    """Fused WrapModel forward:  model(normalize(x)) = x_flat @ W' + b'.

    x_nchw: (B, C, H, W) f32 image batch.  For attack loops, batch >= 128-256
    images per call so the MXU M dimension is filled (biggest algorithmic lever).
    Returns (B, K) f32 logits.
    """
    B = x_nchw.shape[0]
    F, K = prep["F"], prep["K"]
    tf, tk = prep["tf"], prep["tk"]
    f_pad, k_pad = prep["F_pad"], prep["K_pad"]

    b_pad = _round_up(B, 16)  # bf16 packs 16 rows per vreg
    x_flat = x_nchw.reshape(B, F)
    x_p = jnp.zeros((b_pad, f_pad), jnp.bfloat16).at[:B, :F].set(
        x_flat.astype(jnp.bfloat16)
    )

    grid = (k_pad // tk, f_pad // tf)  # reduction (F) axis last
    vmem_limit = min(max(_vmem_bytes(b_pad, tf, tk) + (8 << 20), 32 << 20), 56 << 20)

    out = pl.pallas_call(
        _wrapmodel_kernel,
        out_shape=jax.ShapeDtypeStruct((b_pad, k_pad), jnp.float32),
        grid_spec=pltpu.PrefetchScalarGridSpec(
            num_scalar_prefetch=0,
            grid=grid,
            in_specs=[
                pl.BlockSpec((b_pad, tf), lambda k, f: (0, f)),   # x tile
                pl.BlockSpec((tf, tk), lambda k, f: (f, k)),      # W' tile
                pl.BlockSpec((1, tk), lambda k, f: (0, k)),       # b' tile
            ],
            out_specs=pl.BlockSpec((b_pad, tk), lambda k, f: (0, k)),
        ),
        compiler_params=pltpu.CompilerParams(
            dimension_semantics=("parallel", "arbitrary"),
            vmem_limit_bytes=vmem_limit,
        ),
    )(x_p, prep["w_p"], prep["b_p"])

    return out[:B, :K]


if __name__ == "__main__":
    key = jax.random.PRNGKey(0)
    kx, kw, kb = jax.random.split(key, 3)

    B, C, H, W = 2, 4, 16, 16
    K = 16  # number of classes for the synthetic classifier head
    F = C * H * W

    x = jax.random.uniform(kx, (B, C, H, W), dtype=jnp.float32)  # in [0, 1)
    mean_c = jnp.array([0.485, 0.456, 0.406, 0.5], dtype=jnp.float32)[:C]
    std_c = jnp.array([0.229, 0.224, 0.225, 0.25], dtype=jnp.float32)[:C]
    w = jax.random.normal(kw, (F, K), dtype=jnp.float32) * 0.02
    b = jax.random.normal(kb, (K,), dtype=jnp.float32) * 0.01

    # One-time weight preparation (would be reused across every PGD step).
    prep = prepare_wrap_model(mean_c, std_c, w, b, spatial=H * W, max_batch=256)

    out = wrap_model_forward(x, prep)
    jax.block_until_ready(out)

    # Pure fp32 divide-then-matmul reference (original PyTorch order).
    x_norm_ref = (x - mean_c[None, :, None, None]) / std_c[None, :, None, None]
    ref = x_norm_ref.reshape(B, F) @ w + b[None, :]
    # bf16 weight/activation streaming (+ normalization folding) => looser
    # tolerance than the pure-fp32 path.
    assert jnp.allclose(out, ref, atol=5e-2, rtol=5e-2), "mismatch vs reference"

    print("KERNEL_OK")
</pallas_src>

<mosaic_0001>
module attributes {stable_mosaic.version = 11 : i64} {
  func.func @_wrapmodel_kernel(%arg0: i32, %arg1: i32, %arg2: memref<16x1024xbf16, #tpu.memory_space<vmem>>, %arg3: memref<1024x128xbf16, #tpu.memory_space<vmem>>, %arg4: memref<1x128xf32, #tpu.memory_space<vmem>>, %arg5: memref<16x128xf32, #tpu.memory_space<vmem>>) attributes {dimension_semantics = [#tpu.dimension_semantics<parallel>, #tpu.dimension_semantics<arbitrary>], iteration_bounds = array<i64: 1, 1>, scalar_prefetch = 0 : i64, scratch_operands = 0 : i64, tpu.core_type = #tpu.core_type<tc>, window_params = [{transform_indices = @transform_0, window_bounds = array<i64: 16, 1024>}, {transform_indices = @transform_1, window_bounds = array<i64: 1024, 128>}, {transform_indices = @transform_2, window_bounds = array<i64: 1, 128>}, {transform_indices = @transform_3, window_bounds = array<i64: 16, 128>}]} {
    %c0_i32 = arith.constant 0 : i32
    %0 = arith.cmpi eq, %arg1, %c0_i32 : i32
    %1 = arith.extui %0 : i1 to i32
    %c0_i32_0 = arith.constant 0 : i32
    %2 = arith.cmpi ne, %1, %c0_i32_0 : i32
    scf.if %2 {
      %c0_8 = arith.constant 0 : index
      %c0_9 = arith.constant 0 : index
      %9 = vector.load %arg4[%c0_8, %c0_9] : memref<1x128xf32, #tpu.memory_space<vmem>>, vector<1x128xf32>
      %10 = vector.shape_cast %9 : vector<1x128xf32> to vector<1x128xf32>
      %11 = vector.broadcast %10 : vector<1x128xf32> to vector<16x128xf32>
      %c0_10 = arith.constant 0 : index
      %c0_11 = arith.constant 0 : index
      %12 = vector.load %arg5[%c0_10, %c0_11] : memref<16x128xf32, #tpu.memory_space<vmem>>, vector<16x128xf32>
      tpu.vector_store %arg5[%c0_10, %c0_11], %11 {strides = array<i32>} : memref<16x128xf32, #tpu.memory_space<vmem>>, vector<16x128xf32>,
    } else {
    }
    %c0 = arith.constant 0 : index
    %c0_1 = arith.constant 0 : index
    %3 = vector.load %arg5[%c0, %c0_1] : memref<16x128xf32, #tpu.memory_space<vmem>>, vector<16x128xf32>
    %c0_2 = arith.constant 0 : index
    %c0_3 = arith.constant 0 : index
    %4 = vector.load %arg2[%c0_2, %c0_3] : memref<16x1024xbf16, #tpu.memory_space<vmem>>, vector<16x1024xbf16>
    %c0_4 = arith.constant 0 : index
    %c0_5 = arith.constant 0 : index
    %5 = vector.load %arg3[%c0_4, %c0_5] : memref<1024x128xbf16, #tpu.memory_space<vmem>>, vector<1024x128xbf16>
    %cst = arith.constant dense<0.000000e+00> : vector<16x128xf32>
    %6 = tpu.matmul %4, %5, %cst {dimension_numbers = #tpu.dot_dimension_numbers<[1], [0], [0], [1], [0, 0, 1, 1], [], []>} : vector<16x1024xbf16>, vector<1024x128xbf16>, vector<16x128xf32> -> vector<16x128xf32>
    %7 = arith.addf %3, %6 : vector<16x128xf32>
    %c0_6 = arith.constant 0 : index
    %c0_7 = arith.constant 0 : index
    %8 = vector.load %arg5[%c0_6, %c0_7] : memref<16x128xf32, #tpu.memory_space<vmem>>, vector<16x128xf32>
    tpu.vector_store %arg5[%c0_6, %c0_7], %7 {strides = array<i32>} : memref<16x128xf32, #tpu.memory_space<vmem>>, vector<16x128xf32>,
    return
  }
  func.func @transform_0(%arg0: i32, %arg1: i32) -> (i32, i32) {
    %c0_i32 = arith.constant 0 : i32
    %c0_i32_0 = arith.constant 0 : i32
    return %c0_i32, %arg1 : i32, i32
  }
  func.func @transform_1(%arg0: i32, %arg1: i32) -> (i32, i32) {
    %c0_i32 = arith.constant 0 : i32
    return %arg1, %arg0 : i32, i32
  }
  func.func @transform_2(%arg0: i32, %arg1: i32) -> (i32, i32) {
    %c0_i32 = arith.constant 0 : i32
    %c0_i32_0 = arith.constant 0 : i32
    return %c0_i32, %arg0 : i32, i32
  }
  func.func @transform_3(%arg0: i32, %arg1: i32) -> (i32, i32) {
    %c0_i32 = arith.constant 0 : i32
    %c0_i32_0 = arith.constant 0 : i32
    return %c0_i32, %arg0 : i32, i32
  }
}

</mosaic_0001>

<llo_original>
// kernel: tpu_custom_call.1
$region0: #{tpu_custom_call.1}
  #allocation0 [shape = 'u32[]', space=smem, size = 0x4, offset = 0x4, fixed_abs, tag = 'smem constant byte address 0x4 - core index']
  #allocation1 [shape = 'u32[72,128]{1,0:T(1,128)}', space=vmem, size = 0x9000, scoped, tag = 'internal scratch']
  %s0 = inlined_call_operand.hbm [shape: bf16[16,1024], index: 0, kind: input, shape index: {}]
  %s1 = inlined_call_operand.hbm [shape: bf16[1024,128], index: 1, kind: input, shape index: {}]
  %s2 = inlined_call_operand.vmem [shape: f32[1,128], index: 2, kind: input, shape index: {}]
  %s3 = inlined_call_operand.hbm [shape: f32[16,128], index: 3, kind: output, shape index: {}]
  %s4 = sld [smem:[#allocation0]]
  $region34: #{tpu_custom_call.1} parent=0
    _
  %s6 = ssub.s32 1, %s4
  %s7 = scalar_select 0, %s6, %s4
  $region1: #{tpu_custom_call.1} parent=0
    #allocation2 [shape = 'u8[32768]{0}', space=vmem, size = 0x8000, scoped, tag = 'input window, operand 0, single buffered']
    #allocation3 [shape = 's32[1]{0}', space=sflag, size = 0x4, scoped, tag = 'scoped memory for tpu_custom_call.1']
    #allocation4 [shape = 's32[1]{0}', space=sflag, size = 0x4, scoped, tag = 'scoped memory for tpu_custom_call.1']
    #allocation5 [shape = 'u8[262144]{0}', space=vmem, size = 0x40000, scoped, tag = 'input window, operand 1, single buffered']
    #allocation6 [shape = 's32[1]{0}', space=sflag, size = 0x4, scoped, tag = 'scoped memory for tpu_custom_call.1']
    #allocation7 [shape = 'u8[8192]{0}', space=vmem, size = 0x2000, scoped, tag = 'output window, operand 0, single buffered']
    %8 = vsyncpa [#allocation3], 0
    %9 = vsyncpa [#allocation6], 0
    %10 = vsyncpa [#allocation4], 0
    // Predicated region
    $region2: #{tpu_custom_call.1} parent=1 // pred_check
      _
    $region3: #{tpu_custom_call.1} parent=1 // pred_check_branch
      %12 = sbr.rel (0) target = $region5
    $region4: #{tpu_custom_call.1} parent=1 // pred_region
      %14 = vsyncadd [#allocation3], 0
      %s15 = sshll.u32 %s0, 4
      %s16 = int_to_ptr.hbm [resolvable:$true] %s15
      %s17 = sshll.u32 [#allocation2], 4
      %s18 = int_to_ptr.vmem [resolvable:$true] %s17
      %23 = dma.hbm_to_vmem [thread:$0]  %s16, 1024, %s18, [#allocation3], 512, 512, 32
    $region5: #{tpu_custom_call.1} parent=1 // pred_fallthru
      _
    // Predicated region
    $region6: #{tpu_custom_call.1} parent=1 // pred_check
      _
    $region7: #{tpu_custom_call.1} parent=1 // pred_check_branch
      %25 = sbr.rel (0) target = $region9
    $region8: #{tpu_custom_call.1} parent=1 // pred_region
      %27 = vsyncadd [#allocation6], 0
      %s28 = sshll.u32 %s1, 4
      %s29 = int_to_ptr.hbm [resolvable:$true] %s28
      %s30 = sshll.u32 [#allocation5], 4
      %s31 = int_to_ptr.vmem [resolvable:$true] %s30
      %36 = dma.hbm_to_vmem [thread:$0]  %s29, 8192, %s31, [#allocation6], 64, 64, 4
    $region9: #{tpu_custom_call.1} parent=1 // pred_fallthru
      _
    // Predicated region
    $region10: #{tpu_custom_call.1} parent=1 // pred_check
      _
    $region11: #{tpu_custom_call.1} parent=1 // pred_check_branch
      %38 = sbr.rel (0) target = $region13
    $region12: #{tpu_custom_call.1} parent=1 // pred_region
      _
    $region13: #{tpu_custom_call.1} parent=1 // pred_fallthru
      _
    // Predicated region
    $region14: #{tpu_custom_call.1} parent=1 // pred_check
      _
    $region15: #{tpu_custom_call.1} parent=1 // pred_check_branch
      %40 = sbr.rel (0) target = $region17
    $region16: #{tpu_custom_call.1} parent=1 // pred_region
      %42 = dma.done [#allocation3], 1024
    $region17: #{tpu_custom_call.1} parent=1 // pred_fallthru
      _
    // Predicated region
    $region18: #{tpu_custom_call.1} parent=1 // pred_check
      _
    $region19: #{tpu_custom_call.1} parent=1 // pred_check_branch
      %44 = sbr.rel (0) target = $region21
    $region20: #{tpu_custom_call.1} parent=1 // pred_region
      %46 = dma.done [#allocation6], 8192
    $region21: #{tpu_custom_call.1} parent=1 // pred_fallthru
      _
    %p47 = scmp.eq.s32.totalorder 0, 0
    // Predicated region
    $region22: #{tpu_custom_call.1} parent=1 // pred_check
      %p48 = pneg %p47
    $region23: #{tpu_custom_call.1} parent=1 // pred_check_branch
      %50 = sbr.rel (%p48) target = $region25
    $region24: #{tpu_custom_call.1} parent=1 // pred_region
      %v51 = vld [vmem:[%s2] sm:$0x1]
      %v53 = vperm.slane %v51, 0
      %55 = vst [vmem:[#allocation7] sm:$0xff] %v53
      %56 = vst [vmem:[#allocation7 + $0x8] sm:$0xff] %v53
    $region25: #{tpu_custom_call.1} parent=1 // pred_fallthru
      _
    %v57 = vld [vmem:[#allocation7] sm:$0xff]
    %v58 = vld [vmem:[#allocation7 + $0x8] sm:$0xff]
    %v59 = vld [vmem:[#allocation2] sm:$0xff]
    %v60 = vld [vmem:[#allocation2 + $0x8] sm:$0xff]
    %v61 = vld [vmem:[#allocation2 + $0x10] sm:$0xff]
    %v62 = vld [vmem:[#allocation2 + $0x18] sm:$0xff]
    %v63 = vld [vmem:[#allocation2 + $0x20] sm:$0xff]
    %v64 = vld [vmem:[#allocation2 + $0x28] sm:$0xff]
    %v65 = vld [vmem:[#allocation2 + $0x30] sm:$0xff]
    %v66 = vld [vmem:[#allocation2 + $0x38] sm:$0xff]
    %v67 = vld [vmem:[#allocation5] sm:$0xf]
    %v68 = vld [vmem:[#allocation5 + $0x4] sm:$0xf]
    %v69 = vld [vmem:[#allocation5 + $0x8] sm:$0xf]
    %v70 = vld [vmem:[#allocation5 + $0xc] sm:$0xf]
    %v71 = vld [vmem:[#allocation5 + $0x10] sm:$0xf]
    %v72 = vld [vmem:[#allocation5 + $0x14] sm:$0xf]
    %v73 = vld [vmem:[#allocation5 + $0x18] sm:$0xf]
    %v74 = vld [vmem:[#allocation5 + $0x1c] sm:$0xf]
    %v75 = vld [vmem:[#allocation5 + $0x20] sm:$0xf]
    %v76 = vld [vmem:[#allocation5 + $0x24] sm:$0xf]
    %v77 = vld [vmem:[#allocation5 + $0x28] sm:$0xf]
    %v78 = vld [vmem:[#allocation5 + $0x2c] sm:$0xf]
    %v79 = vld [vmem:[#allocation5 + $0x30] sm:$0xf]
    %v80 = vld [vmem:[#allocation5 + $0x34] sm:$0xf]
    %v81 = vld [vmem:[#allocation5 + $0x38] sm:$0xf]
    %v82 = vld [vmem:[#allocation5 + $0x3c] sm:$0xf]
    %v83 = vld [vmem:[#allocation5 + $0x40] sm:$0xf]
    %v84 = vld [vmem:[#allocation5 + $0x44] sm:$0xf]
    %v85 = vld [vmem:[#allocation5 + $0x48] sm:$0xf]
    %v86 = vld [vmem:[#allocation5 + $0x4c] sm:$0xf]
    %v87 = vld [vmem:[#allocation5 + $0x50] sm:$0xf]
    %v88 = vld [vmem:[#allocation5 + $0x54] sm:$0xf]
    %v89 = vld [vmem:[#allocation5 + $0x58] sm:$0xf]
    %v90 = vld [vmem:[#allocation5 + $0x5c] sm:$0xf]
    %v91 = vld [vmem:[#allocation5 + $0x60] sm:$0xf]
    %v92 = vld [vmem:[#allocation5 + $0x64] sm:$0xf]
    %v93 = vld [vmem:[#allocation5 + $0x68] sm:$0xf]
    %v94 = vld [vmem:[#allocation5 + $0x6c] sm:$0xf]
    %v95 = vld [vmem:[#allocation5 + $0x70] sm:$0xf]
    %v96 = vld [vmem:[#allocation5 + $0x74] sm:$0xf]
    %v97 = vld [vmem:[#allocation5 + $0x78] sm:$0xf]
    %v98 = vld [vmem:[#allocation5 + $0x7c] sm:$0xf]
    %v99 = vld [vmem:[#allocation5 + $0x80] sm:$0xf]
    %v100 = vld [vmem:[#allocation5 + $0x84] sm:$0xf]
    %v101 = vld [vmem:[#allocation5 + $0x88] sm:$0xf]
    %v102 = vld [vmem:[#allocation5 + $0x8c] sm:$0xf]
    %v103 = vld [vmem:[#allocation5 + $0x90] sm:$0xf]
    %v104 = vld [vmem:[#allocation5 + $0x94] sm:$0xf]
    %v105 = vld [vmem:[#allocation5 + $0x98] sm:$0xf]
    %v106 = vld [vmem:[#allocation5 + $0x9c] sm:$0xf]
    %v107 = vld [vmem:[#allocation5 + $0xa0] sm:$0xf]
    %v108 = vld [vmem:[#allocation5 + $0xa4] sm:$0xf]
    %v109 = vld [vmem:[#allocation5 + $0xa8] sm:$0xf]
    %v110 = vld [vmem:[#allocation5 + $0xac] sm:$0xf]
    %v111 = vld [vmem:[#allocation5 + $0xb0] sm:$0xf]
    %v112 = vld [vmem:[#allocation5 + $0xb4] sm:$0xf]
    %v113 = vld [vmem:[#allocation5 + $0xb8] sm:$0xf]
    %v114 = vld [vmem:[#allocation5 + $0xbc] sm:$0xf]
    %v115 = vld [vmem:[#allocation5 + $0xc0] sm:$0xf]
    %v116 = vld [vmem:[#allocation5 + $0xc4] sm:$0xf]
    %v117 = vld [vmem:[#allocation5 + $0xc8] sm:$0xf]
    %v118 = vld [vmem:[#allocation5 + $0xcc] sm:$0xf]
    %v119 = vld [vmem:[#allocation5 + $0xd0] sm:$0xf]
    %v120 = vld [vmem:[#allocation5 + $0xd4] sm:$0xf]
    %v121 = vld [vmem:[#allocation5 + $0xd8] sm:$0xf]
    %v122 = vld [vmem:[#allocation5 + $0xdc] sm:$0xf]
    %v123 = vld [vmem:[#allocation5 + $0xe0] sm:$0xf]
    %v124 = vld [vmem:[#allocation5 + $0xe4] sm:$0xf]
    %v125 = vld [vmem:[#allocation5 + $0xe8] sm:$0xf]
    %v126 = vld [vmem:[#allocation5 + $0xec] sm:$0xf]
    %v127 = vld [vmem:[#allocation5 + $0xf0] sm:$0xf]
    %v128 = vld [vmem:[#allocation5 + $0xf4] sm:$0xf]
    %v129 = vld [vmem:[#allocation5 + $0xf8] sm:$0xf]
    %v130 = vld [vmem:[#allocation5 + $0xfc] sm:$0xf]
    %v131 = vld [vmem:[#allocation5 + $0x100] sm:$0xf]
    %v132 = vld [vmem:[#allocation5 + $0x104] sm:$0xf]
    %v133 = vld [vmem:[#allocation5 + $0x108] sm:$0xf]
    %v134 = vld [vmem:[#allocation5 + $0x10c] sm:$0xf]
    %v135 = vld [vmem:[#allocation5 + $0x110] sm:$0xf]
    %v136 = vld [vmem:[#allocation5 + $0x114] sm:$0xf]
    %v137 = vld [vmem:[#allocation5 + $0x118] sm:$0xf]
    %v138 = vld [vmem:[#allocation5 + $0x11c] sm:$0xf]
    %v139 = vld [vmem:[#allocation5 + $0x120] sm:$0xf]
    %v140 = vld [vmem:[#allocation5 + $0x124] sm:$0xf]
    %v141 = vld [vmem:[#allocation5 + $0x128] sm:$0xf]
    %v142 = vld [vmem:[#allocation5 + $0x12c] sm:$0xf]
    %v143 = vld [vmem:[#allocation5 + $0x130] sm:$0xf]
    %v144 = vld [vmem:[#allocation5 + $0x134] sm:$0xf]
    %v145 = vld [vmem:[#allocation5 + $0x138] sm:$0xf]
    %v146 = vld [vmem:[#allocation5 + $0x13c] sm:$0xf]
    %v147 = vld [vmem:[#allocation5 + $0x140] sm:$0xf]
    %v148 = vld [vmem:[#allocation5 + $0x144] sm:$0xf]
    %v149 = vld [vmem:[#allocation5 + $0x148] sm:$0xf]
    %v150 = vld [vmem:[#allocation5 + $0x14c] sm:$0xf]
    %v151 = vld [vmem:[#allocation5 + $0x150] sm:$0xf]
    %v152 = vld [vmem:[#allocation5 + $0x154] sm:$0xf]
    %v153 = vld [vmem:[#allocation5 + $0x158] sm:$0xf]
    %v154 = vld [vmem:[#allocation5 + $0x15c] sm:$0xf]
    %v155 = vld [vmem:[#allocation5 + $0x160] sm:$0xf]
    %v156 = vld [vmem:[#allocation5 + $0x164] sm:$0xf]
    %v157 = vld [vmem:[#allocation5 + $0x168] sm:$0xf]
    %v158 = vld [vmem:[#allocation5 + $0x16c] sm:$0xf]
    %v159 = vld [vmem:[#allocation5 + $0x170] sm:$0xf]
    %v160 = vld [vmem:[#allocation5 + $0x174] sm:$0xf]
    %v161 = vld [vmem:[#allocation5 + $0x178] sm:$0xf]
    %v162 = vld [vmem:[#allocation5 + $0x17c] sm:$0xf]
    %v163 = vld [vmem:[#allocation5 + $0x180] sm:$0xf]
    %v164 = vld [vmem:[#allocation5 + $0x184] sm:$0xf]
    %v165 = vld [vmem:[#allocation5 + $0x188] sm:$0xf]
    %v166 = vld [vmem:[#allocation5 + $0x18c] sm:$0xf]
    %v167 = vld [vmem:[#allocation5 + $0x190] sm:$0xf]
    %v168 = vld [vmem:[#allocation5 + $0x194] sm:$0xf]
    %v169 = vld [vmem:[#allocation5 + $0x198] sm:$0xf]
    %v170 = vld [vmem:[#allocation5 + $0x19c] sm:$0xf]
    %v171 = vld [vmem:[#allocation5 + $0x1a0] sm:$0xf]
    %v172 = vld [vmem:[#allocation5 + $0x1a4] sm:$0xf]
    %v173 = vld [vmem:[#allocation5 + $0x1a8] sm:$0xf]
    %v174 = vld [vmem:[#allocation5 + $0x1ac] sm:$0xf]
    %v175 = vld [vmem:[#allocation5 + $0x1b0] sm:$0xf]
    %v176 = vld [vmem:[#allocation5 + $0x1b4] sm:$0xf]
    %v177 = vld [vmem:[#allocation5 + $0x1b8] sm:$0xf]
    %v178 = vld [vmem:[#allocation5 + $0x1bc] sm:$0xf]
    %v179 = vld [vmem:[#allocation5 + $0x1c0] sm:$0xf]
    %v180 = vld [vmem:[#allocation5 + $0x1c4] sm:$0xf]
    %v181 = vld [vmem:[#allocation5 + $0x1c8] sm:$0xf]
    %v182 = vld [vmem:[#allocation5 + $0x1cc] sm:$0xf]
    %v183 = vld [vmem:[#allocation5 + $0x1d0] sm:$0xf]
    %v184 = vld [vmem:[#allocation5 + $0x1d4] sm:$0xf]
    %v185 = vld [vmem:[#allocation5 + $0x1d8] sm:$0xf]
    %v186 = vld [vmem:[#allocation5 + $0x1dc] sm:$0xf]
    %v187 = vld [vmem:[#allocation5 + $0x1e0] sm:$0xf]
    %v188 = vld [vmem:[#allocation5 + $0x1e4] sm:$0xf]
    %v189 = vld [vmem:[#allocation5 + $0x1e8] sm:$0xf]
    %v190 = vld [vmem:[#allocation5 + $0x1ec] sm:$0xf]
    %v191 = vld [vmem:[#allocation5 + $0x1f0] sm:$0xf]
    %v192 = vld [vmem:[#allocation5 + $0x1f4] sm:$0xf]
    %v193 = vld [vmem:[#allocation5 + $0x1f8] sm:$0xf]
    %v194 = vld [vmem:[#allocation5 + $0x1fc] sm:$0xf]
    %v203 = vunpack.c.l.b16 %v59
    %v204 = vunpack.c.h.b16 %v59
    %v205 = vunpack.c.l.b16 %v60
    %v206 = vunpack.c.h.b16 %v60
    %v207 = vunpack.c.l.b16 %v61
    %v208 = vunpack.c.h.b16 %v61
    %v209 = vunpack.c.l.b16 %v62
    %v210 = vunpack.c.h.b16 %v62
    %v211 = vunpack.c.l.b16 %v63
    %v212 = vunpack.c.h.b16 %v63
    %v213 = vunpack.c.l.b16 %v64
    %v214 = vunpack.c.h.b16 %v64
    %v215 = vunpack.c.l.b16 %v65
    %v216 = vunpack.c.h.b16 %v65
    %v217 = vunpack.c.l.b16 %v66
    %v218 = vunpack.c.h.b16 %v66
    %v219 = vpack.c.b16 %v211, %v203
    %v220 = vpack.c.b16 %v212, %v204
    %v221 = vpack.c.b16 %v213, %v205
    %v222 = vpack.c.b16 %v214, %v206
    %v223 = vpack.c.b16 %v215, %v207
    %v224 = vpack.c.b16 %v216, %v208
    %v225 = vpack.c.b16 %v217, %v209
    %v226 = vpack.c.b16 %v218, %v210
    %v363 = vunpack.c.l.b16 %v67
    %v364 = vunpack.c.l.b16 %v68
    %v365 = vunpack.c.l.b16 %v69
    %v366 = vunpack.c.l.b16 %v70
    %v367 = vunpack.c.l.b16 %v71
    %v368 = vunpack.c.l.b16 %v72
    %v369 = vunpack.c.l.b16 %v73
    %v370 = vunpack.c.l.b16 %v74
    %v371 = vunpack.c.l.b16 %v75
    %v372 = vunpack.c.l.b16 %v76
    %v373 = vunpack.c.l.b16 %v77
    %v374 = vunpack.c.l.b16 %v78
    %v375 = vunpack.c.l.b16 %v79
    %v376 = vunpack.c.l.b16 %v80
    %v377 = vunpack.c.l.b16 %v81
    %v378 = vunpack.c.l.b16 %v82
    %v379 = vunpack.c.l.b16 %v83
    %v380 = vunpack.c.l.b16 %v84
    %v381 = vunpack.c.l.b16 %v85
    %v382 = vunpack.c.l.b16 %v86
    %v383 = vunpack.c.l.b16 %v87
    %v384 = vunpack.c.l.b16 %v88
    %v385 = vunpack.c.l.b16 %v89
    %v386 = vunpack.c.l.b16 %v90
    %v387 = vunpack.c.l.b16 %v91
    %v388 = vunpack.c.l.b16 %v92
    %v389 = vunpack.c.l.b16 %v93
    %v390 = vunpack.c.l.b16 %v94
    %v391 = vunpack.c.l.b16 %v95
    %v392 = vunpack.c.l.b16 %v96
    %v393 = vunpack.c.l.b16 %v97
    %v394 = vunpack.c.l.b16 %v98
    %v395 = vunpack.c.l.b16 %v99
    %v396 = vunpack.c.l.b16 %v100
    %v397 = vunpack.c.l.b16 %v101
    %v398 = vunpack.c.l.b16 %v102
    %v399 = vunpack.c.l.b16 %v103
    %v400 = vunpack.c.l.b16 %v104
    %v401 = vunpack.c.l.b16 %v105
    %v402 = vunpack.c.l.b16 %v106
    %v403 = vunpack.c.l.b16 %v107
    %v404 = vunpack.c.l.b16 %v108
    %v405 = vunpack.c.l.b16 %v109
    %v406 = vunpack.c.l.b16 %v110
    %v407 = vunpack.c.l.b16 %v111
    %v408 = vunpack.c.l.b16 %v112
    %v409 = vunpack.c.l.b16 %v113
    %v410 = vunpack.c.l.b16 %v114
    %v411 = vunpack.c.l.b16 %v115
    %v412 = vunpack.c.l.b16 %v116
    %v413 = vunpack.c.l.b16 %v117
    %v414 = vunpack.c.l.b16 %v118
    %v415 = vunpack.c.l.b16 %v119
    %v416 = vunpack.c.l.b16 %v120
    %v417 = vunpack.c.l.b16 %v121
    %v418 = vunpack.c.l.b16 %v122
    %v419 = vunpack.c.l.b16 %v123
    %v420 = vunpack.c.l.b16 %v124
    %v421 = vunpack.c.l.b16 %v125
    %v422 = vunpack.c.l.b16 %v126
    %v423 = vunpack.c.l.b16 %v127
    %v424 = vunpack.c.l.b16 %v128
    %v425 = vunpack.c.l.b16 %v129
    %v426 = vunpack.c.l.b16 %v130
    %v427 = vunpack.c.l.b16 %v131
    %v428 = vunpack.c.l.b16 %v132
    %v429 = vunpack.c.l.b16 %v133
    %v430 = vunpack.c.l.b16 %v134
    %v431 = vunpack.c.l.b16 %v135
    %v432 = vunpack.c.l.b16 %v136
    %v433 = vunpack.c.l.b16 %v137
    %v434 = vunpack.c.l.b16 %v138
    %v435 = vunpack.c.l.b16 %v139
    %v436 = vunpack.c.l.b16 %v140
    %v437 = vunpack.c.l.b16 %v141
    %v438 = vunpack.c.l.b16 %v142
    %v439 = vunpack.c.l.b16 %v143
    %v440 = vunpack.c.l.b16 %v144
    %v441 = vunpack.c.l.b16 %v145
    %v442 = vunpack.c.l.b16 %v146
    %v443 = vunpack.c.l.b16 %v147
    %v444 = vunpack.c.l.b16 %v148
    %v445 = vunpack.c.l.b16 %v149
    %v446 = vunpack.c.l.b16 %v150
    %v447 = vunpack.c.l.b16 %v151
    %v448 = vunpack.c.l.b16 %v152
    %v449 = vunpack.c.l.b16 %v153
    %v450 = vunpack.c.l.b16 %v154
    %v451 = vunpack.c.l.b16 %v155
    %v452 = vunpack.c.l.b16 %v156
    %v453 = vunpack.c.l.b16 %v157
    %v454 = vunpack.c.l.b16 %v158
    %v455 = vunpack.c.l.b16 %v159
    %v456 = vunpack.c.l.b16 %v160
    %v457 = vunpack.c.l.b16 %v161
    %v458 = vunpack.c.l.b16 %v162
    %v459 = vunpack.c.l.b16 %v163
    %v460 = vunpack.c.l.b16 %v164
    %v461 = vunpack.c.l.b16 %v165
    %v462 = vunpack.c.l.b16 %v166
    %v463 = vunpack.c.l.b16 %v167
    %v464 = vunpack.c.l.b16 %v168
    %v465 = vunpack.c.l.b16 %v169
    %v466 = vunpack.c.l.b16 %v170
    %v467 = vunpack.c.l.b16 %v171
    %v468 = vunpack.c.l.b16 %v172
    %v469 = vunpack.c.l.b16 %v173
    %v470 = vunpack.c.l.b16 %v174
    %v471 = vunpack.c.l.b16 %v175
    %v472 = vunpack.c.l.b16 %v176
    %v473 = vunpack.c.l.b16 %v177
    %v474 = vunpack.c.l.b16 %v178
    %v475 = vunpack.c.l.b16 %v179
    %v476 = vunpack.c.l.b16 %v180
    %v477 = vunpack.c.l.b16 %v181
    %v478 = vunpack.c.l.b16 %v182
    %v479 = vunpack.c.l.b16 %v183
    %v480 = vunpack.c.l.b16 %v184
    %v481 = vunpack.c.l.b16 %v185
    %v482 = vunpack.c.l.b16 %v186
    %v483 = vunpack.c.l.b16 %v187
    %v484 = vunpack.c.l.b16 %v188
    %v485 = vunpack.c.l.b16 %v189
    %v486 = vunpack.c.l.b16 %v190
    %v487 = vunpack.c.l.b16 %v191
    %v488 = vunpack.c.l.b16 %v192
    %v489 = vunpack.c.l.b16 %v193
    %v490 = vunpack.c.l.b16 %v194
    %v491 = vpack.c.b16 %v364, %v363
    %v492 = vpack.c.b16 %v366, %v365
    %v493 = vpack.c.b16 %v368, %v367
    %v494 = vpack.c.b16 %v370, %v369
    %v495 = vpack.c.b16 %v372, %v371
    %v496 = vpack.c.b16 %v374, %v373
    %v497 = vpack.c.b16 %v376, %v375
    %v498 = vpack.c.b16 %v378, %v377
    %v499 = vpack.c.b16 %v380, %v379
    %v500 = vpack.c.b16 %v382, %v381
    %v501 = vpack.c.b16 %v384, %v383
    %v502 = vpack.c.b16 %v386, %v385
    %v503 = vpack.c.b16 %v388, %v387
    %v504 = vpack.c.b16 %v390, %v389
    %v505 = vpack.c.b16 %v392, %v391
    %v506 = vpack.c.b16 %v394, %v393
    %v507 = vpack.c.b16 %v396, %v395
    %v508 = vpack.c.b16 %v398, %v397
    %v509 = vpack.c.b16 %v400, %v399
    %v510 = vpack.c.b16 %v402, %v401
    %v511 = vpack.c.b16 %v404, %v403
    %v512 = vpack.c.b16 %v406, %v405
    %v513 = vpack.c.b16 %v408, %v407
    %v514 = vpack.c.b16 %v410, %v409
    %v515 = vpack.c.b16 %v412, %v411
    %v516 = vpack.c.b16 %v414, %v413
    %v517 = vpack.c.b16 %v416, %v415
    %v518 = vpack.c.b16 %v418, %v417
    %v519 = vpack.c.b16 %v420, %v419
    %v520 = vpack.c.b16 %v422, %v421
    %v521 = vpack.c.b16 %v424, %v423
    %v522 = vpack.c.b16 %v426, %v425
    %v523 = vpack.c.b16 %v428, %v427
    %v524 = vpack.c.b16 %v430, %v429
    %v525 = vpack.c.b16 %v432, %v431
    %v526 = vpack.c.b16 %v434, %v433
    %v527 = vpack.c.b16 %v436, %v435
    %v528 = vpack.c.b16 %v438, %v437
    %v529 = vpack.c.b16 %v440, %v439
    %v530 = vpack.c.b16 %v442, %v441
    %v531 = vpack.c.b16 %v444, %v443
    %v532 = vpack.c.b16 %v446, %v445
    %v533 = vpack.c.b16 %v448, %v447
    %v534 = vpack.c.b16 %v450, %v449
    %v535 = vpack.c.b16 %v452, %v451
    %v536 = vpack.c.b16 %v454, %v453
    %v537 = vpack.c.b16 %v456, %v455
    %v538 = vpack.c.b16 %v458, %v457
    %v539 = vpack.c.b16 %v460, %v459
    %v540 = vpack.c.b16 %v462, %v461
    %v541 = vpack.c.b16 %v464, %v463
    %v542 = vpack.c.b16 %v466, %v465
    %v543 = vpack.c.b16 %v468, %v467
    %v544 = vpack.c.b16 %v470, %v469
    %v545 = vpack.c.b16 %v472, %v471
    %v546 = vpack.c.b16 %v474, %v473
    %v547 = vpack.c.b16 %v476, %v475
    %v548 = vpack.c.b16 %v478, %v477
    %v549 = vpack.c.b16 %v480, %v479
    %v550 = vpack.c.b16 %v482, %v481
    %v551 = vpack.c.b16 %v484, %v483
    %v552 = vpack.c.b16 %v486, %v485
    %v553 = vpack.c.b16 %v488, %v487
    %v554 = vpack.c.b16 %v490, %v489
    %619 = vmatpush.bf16.msra.mxu0 %v498
    %620 = vmatpush.bf16.msra.mxu0 %v497
    %621 = vmatpush.bf16.msra.mxu0 %v496
    %622 = vmatpush.bf16.msra.mxu0 %v495
    %623 = vmatpush.bf16.msra.mxu0 %v494
    %624 = vmatpush.bf16.msra.mxu0 %v493
    %625 = vmatpush.bf16.msra.mxu0 %v492
    %626 = vmatpush.bf16.msra.mxu0 %v491
    %627 = vmatmul.bf16.gmra.mxu0 %v219
    %v628 = vpop.f32.mrf.mxu0
    %v629 = vadd.f32 0.0, %v628
    %v630 = vpop.f32.mrf.mxu0
    %v631 = vadd.f32 0.0, %v630
    %632 = vdwg.mxu0
    %633 = vmatpush.bf16.msra.mxu0 %v506
    %634 = vmatpush.bf16.msra.mxu0 %v505
    %635 = vmatpush.bf16.msra.mxu0 %v504
    %636 = vmatpush.bf16.msra.mxu0 %v503
    %637 = vmatpush.bf16.msra.mxu0 %v502
    %638 = vmatpush.bf16.msra.mxu0 %v501
    %639 = vmatpush.bf16.msra.mxu0 %v500
    %640 = vmatpush.bf16.msra.mxu0 %v499
    %641 = vmatmul.bf16.gmra.mxu0 %v220
    %v642 = vpop.f32.mrf.mxu0
    %v643 = vadd.f32 %v629, %v642
    %v644 = vpop.f32.mrf.mxu0
    %v645 = vadd.f32 %v631, %v644
    %646 = vdwg.mxu0
    %647 = vmatpush.bf16.msra.mxu0 %v514
    %648 = vmatpush.bf16.msra.mxu0 %v513
    %649 = vmatpush.bf16.msra.mxu0 %v512
    %650 = vmatpush.bf16.msra.mxu0 %v511
    %651 = vmatpush.bf16.msra.mxu0 %v510
    %652 = vmatpush.bf16.msra.mxu0 %v509
    %653 = vmatpush.bf16.msra.mxu0 %v508
    %654 = vmatpush.bf16.msra.mxu0 %v507
    %655 = vmatmul.bf16.gmra.mxu0 %v221
    %v656 = vpop.f32.mrf.mxu0
    %v657 = vadd.f32 %v643, %v656
    %v658 = vpop.f32.mrf.mxu0
    %v659 = vadd.f32 %v645, %v658
    %660 = vdwg.mxu0
    %661 = vmatpush.bf16.msra.mxu0 %v522
    %662 = vmatpush.bf16.msra.mxu0 %v521
    %663 = vmatpush.bf16.msra.mxu0 %v520
    %664 = vmatpush.bf16.msra.mxu0 %v519
    %665 = vmatpush.bf16.msra.mxu0 %v518
    %666 = vmatpush.bf16.msra.mxu0 %v517
    %667 = vmatpush.bf16.msra.mxu0 %v516
    %668 = vmatpush.bf16.msra.mxu0 %v515
    %669 = vmatmul.bf16.gmra.mxu0 %v222
    %v670 = vpop.f32.mrf.mxu0
    %v671 = vadd.f32 %v657, %v670
    %v672 = vpop.f32.mrf.mxu0
    %v673 = vadd.f32 %v659, %v672
    %674 = vdwg.mxu0
    %675 = vmatpush.bf16.msra.mxu0 %v530
    %676 = vmatpush.bf16.msra.mxu0 %v529
    %677 = vmatpush.bf16.msra.mxu0 %v528
    %678 = vmatpush.bf16.msra.mxu0 %v527
    %679 = vmatpush.bf16.msra.mxu0 %v526
    %680 = vmatpush.bf16.msra.mxu0 %v525
    %681 = vmatpush.bf16.msra.mxu0 %v524
    %682 = vmatpush.bf16.msra.mxu0 %v523
    %683 = vmatmul.bf16.gmra.mxu0 %v223
    %v684 = vpop.f32.mrf.mxu0
    %v685 = vadd.f32 %v671, %v684
    %v686 = vpop.f32.mrf.mxu0
    %v687 = vadd.f32 %v673, %v686
    %688 = vdwg.mxu0
    %689 = vmatpush.bf16.msra.mxu0 %v538
    %690 = vmatpush.bf16.msra.mxu0 %v537
    %691 = vmatpush.bf16.msra.mxu0 %v536
    %692 = vmatpush.bf16.msra.mxu0 %v535
    %693 = vmatpush.bf16.msra.mxu0 %v534
    %694 = vmatpush.bf16.msra.mxu0 %v533
    %695 = vmatpush.bf16.msra.mxu0 %v532
    %696 = vmatpush.bf16.msra.mxu0 %v531
    %697 = vmatmul.bf16.gmra.mxu0 %v224
    %v698 = vpop.f32.mrf.mxu0
    %v699 = vadd.f32 %v685, %v698
    %v700 = vpop.f32.mrf.mxu0
    %v701 = vadd.f32 %v687, %v700
    %702 = vdwg.mxu0
    %703 = vmatpush.bf16.msra.mxu0 %v546
    %704 = vmatpush.bf16.msra.mxu0 %v545
    %705 = vmatpush.bf16.msra.mxu0 %v544
    %706 = vmatpush.bf16.msra.mxu0 %v543
    %707 = vmatpush.bf16.msra.mxu0 %v542
    %708 = vmatpush.bf16.msra.mxu0 %v541
    %709 = vmatpush.bf16.msra.mxu0 %v540
    %710 = vmatpush.bf16.msra.mxu0 %v539
    %711 = vmatmul.bf16.gmra.mxu0 %v225
    %v712 = vpop.f32.mrf.mxu0
    %v713 = vadd.f32 %v699, %v712
    %v714 = vpop.f32.mrf.mxu0
    %v715 = vadd.f32 %v701, %v714
    %716 = vdwg.mxu0
    %717 = vmatpush.bf16.msra.mxu0 %v554
    %718 = vmatpush.bf16.msra.mxu0 %v553
    %719 = vmatpush.bf16.msra.mxu0 %v552
    %720 = vmatpush.bf16.msra.mxu0 %v551
    %721 = vmatpush.bf16.msra.mxu0 %v550
    %722 = vmatpush.bf16.msra.mxu0 %v549
    %723 = vmatpush.bf16.msra.mxu0 %v548
    %724 = vmatpush.bf16.msra.mxu0 %v547
    %725 = vmatmul.bf16.gmra.mxu0 %v226
    %v726 = vpop.f32.mrf.mxu0
    %v727 = vadd.f32 %v713, %v726
    %v728 = vpop.f32.mrf.mxu0
    %v729 = vadd.f32 %v715, %v728
    %730 = vdwg.mxu0
    %v731 = vadd.f32 %v57, %v727
    %v732 = vadd.f32 %v58, %v729
    %733 = vst [vmem:[#allocation7] sm:$0xff] %v731
    %734 = vst [vmem:[#allocation7 + $0x8] sm:$0xff] %v732
    // Predicated region
    $region26: #{tpu_custom_call.1} parent=1 // pred_check
      _
    $region27: #{tpu_custom_call.1} parent=1 // pred_check_branch
      %736 = sbr.rel (0) target = $region29
    $region28: #{tpu_custom_call.1} parent=1 // pred_region
      %738 = vsyncadd [#allocation4], 0
      %s739 = sshll.u32 [#allocation7], 4
      %s740 = int_to_ptr.vmem [resolvable:$true] %s739
      %s741 = sshll.u32 %s3, 4
      %s742 = int_to_ptr.hbm [resolvable:$true] %s741
      %747 = dma.vmem_to_hbm [thread:$0]  %s740, 256, %s742, [#allocation4], 128, 128, 8
    $region29: #{tpu_custom_call.1} parent=1 // pred_fallthru
      _
    // Predicated region
    $region30: #{tpu_custom_call.1} parent=1 // pred_check
      _
    $region31: #{tpu_custom_call.1} parent=1 // pred_check_branch
      %749 = sbr.rel (0) target = $region33
    $region32: #{tpu_custom_call.1} parent=1 // pred_region
      %751 = dma.done [#allocation4], 256
    $region33: #{tpu_custom_call.1} parent=1 // pred_fallthru
      _
    %752 = vsyncpa [#allocation3], 1
    %753 = vsyncpa [#allocation6], 1
    %754 = vsyncpa [#allocation4], 1

</llo_original>
